<compile_context>
chip_gen: v6e
topology: v6e:2x2x1
jax: 0.10.0
libtpu: 0.0.40
codegen_flags: <defaults>
</compile_context>

<pallas_src>
import functools

import jax
import jax.numpy as jnp
from jax.experimental import pallas as pl
from jax.experimental.pallas import tpu as pltpu


def _shoot_infs(x):
    """Vectorized shoot_infs: zero the infs, then replace them with the max of
    the (inf-zeroed) tensor. No-op when x has no infs."""
    mask = jnp.isinf(x)
    xz = jnp.where(mask, jnp.float32(0.0), x)
    return jnp.where(mask, jnp.max(xz), xz)


def sinkhorn_kernel(logits_ref, out_ref, *, inv_epsilon, num_iters, n_rows, n_cols):
    # n_rows = B (= Q.shape[1]), n_cols = K (= Q.shape[0]).
    x = logits_ref[...].astype(jnp.float32)

    # Fused prologue: exp((x - max) / eps) in a single pass, written straight
    # into out_ref so q has exactly one VMEM home for the rest of the kernel.
    # Values are <= 1, so no inf can appear (PyTorch's shoot_infs here is a
    # provable no-op); the global `Q /= sum(Q)` is dropped because a uniform
    # scale cancels exactly in the first column normalization.
    m = jnp.max(x)
    out_ref[...] = jnp.exp((x - m) * jnp.float32(inv_epsilon))   # q == Q.T, [B, K]

    # Uniform marginals (imb_factor <= 1 branch).
    r = jnp.float32(1.0 / n_cols)                                # r = ones(K)/K
    c = jnp.float32(1.0 / n_rows)                                # c = ones(B)/B

    for _ in range(num_iters):                                   # static unroll
        q = out_ref[...]
        # Q.sum(1) == q.sum(axis=0) -> [1, K]  (sublane reduce)
        colsum = jnp.sum(q, axis=0, keepdims=True)
        u = _shoot_infs(r * pl.reciprocal(colsum, approx=False))
        # Q.sum(0) after applying u == rowsum(q * u) == q @ u^T  -> [B, 1].
        # Done on the MXU so the XLU lane reduce and the q*u materialization
        # disappear from the per-iteration VPU/XLU cost.
        row = jax.lax.dot_general(
            q, u,
            dimension_numbers=(((1,), (1,)), ((), ())),
            preferred_element_type=jnp.float32,
        )
        # Single fused elementwise update: Q *= u[:,None]; Q *= (c/Q.sum(0))[None,:]
        out_ref[...] = q * u * (c * pl.reciprocal(row, approx=False))

    # (Q / Q.sum(0, keepdim=True)).t() == q * (1 / q.sum(axis=1, keepdims=True))
    q = out_ref[...]
    inv_rowsum = pl.reciprocal(jnp.sum(q, axis=1, keepdims=True), approx=False)
    out_ref[...] = (q * inv_rowsum).astype(jnp.float32)


def _vmem_limit_bytes():
    """Generation-aware VMEM limit: ~3/4 of per-core capacity (48 MiB on v7x,
    96 MiB on v5e/v6e), conservative 48 MiB fallback if the query fails."""
    try:
        info = pltpu.get_tpu_info()
        cap = getattr(info, "vmem_capacity_bytes", None)
        if cap:
            return int(min(cap * 3 // 4, 100 * 1024 * 1024))
    except Exception:
        pass
    return 48 * 1024 * 1024


_BUFFERED_OK = True  # flipped to False if pl.Buffered(1) is rejected by this jax build


def sinkhorn_knopp(logits, *, epsilon=0.05, num_iters=3, imb_factor=1.0):
    global _BUFFERED_OK
    assert imb_factor <= 1.0, "imb_factor > 1 branch not implemented"
    b, k = logits.shape
    logits = logits.astype(jnp.float32)

    kernel = functools.partial(
        sinkhorn_kernel,
        inv_epsilon=1.0 / epsilon,
        num_iters=num_iters,
        n_rows=b,
        n_cols=k,
    )

    compiler_params = pltpu.CompilerParams(
        dimension_semantics=("arbitrary",),
        vmem_limit_bytes=_vmem_limit_bytes(),
    )

    def build(buffer_count):
        if buffer_count is None:
            in_spec = pl.BlockSpec((b, k), lambda i: (0, 0))
            out_spec = pl.BlockSpec((b, k), lambda i: (0, 0))
        else:
            # grid=(1,): nothing to pipeline, so single-buffer both blocks to
            # halve the BlockSpec VMEM footprint.
            in_spec = pl.BlockSpec((b, k), lambda i: (0, 0),
                                   pipeline_mode=pl.Buffered(buffer_count))
            out_spec = pl.BlockSpec((b, k), lambda i: (0, 0),
                                    pipeline_mode=pl.Buffered(buffer_count))
        return pl.pallas_call(
            kernel,
            out_shape=jax.ShapeDtypeStruct((b, k), jnp.float32),
            grid_spec=pl.GridSpec(
                grid=(1,),
                in_specs=[in_spec],
                out_specs=out_spec,
            ),
            compiler_params=compiler_params,
        )

    if _BUFFERED_OK:
        try:
            return build(1)(logits)
        except Exception:
            _BUFFERED_OK = False
    return build(None)(logits)


def sinkhorn_knopp_ref(logits, *, epsilon=0.05, num_iters=3):
    """Pure-JAX reference mirroring the PyTorch code (validation only)."""
    q = logits.astype(jnp.float32) / epsilon
    q = jnp.exp(q - jnp.max(q)).T            # Q: [K, B]
    q = _shoot_infs(q)
    q = q / jnp.sum(q)
    K, B = q.shape
    r = jnp.float32(1.0 / K)
    c = jnp.float32(1.0 / B)
    for _ in range(num_iters):
        u = _shoot_infs(r / jnp.sum(q, axis=1))
        q = q * u[:, None]
        q = q * (c / jnp.sum(q, axis=0))[None, :]
    return (q / jnp.sum(q, axis=0, keepdims=True)).T.astype(jnp.float32)


if __name__ == "__main__":
    key = jax.random.PRNGKey(0)

    # Case 1: lane-aligned K.
    B, K = 8, 128
    logits = jax.random.normal(key, (B, K), dtype=jnp.float32)
    ref = sinkhorn_knopp_ref(logits, epsilon=0.05, num_iters=3)
    out = sinkhorn_knopp(logits, epsilon=0.05, num_iters=3, imb_factor=1.0)
    out = jax.block_until_ready(out)
    assert out.shape == (B, K) and out.dtype == jnp.float32
    assert jnp.allclose(out, ref, rtol=5e-4, atol=2e-6), float(
        jnp.max(jnp.abs(out - ref))
    )

    # Case 2: non-128-aligned K (no wrapper padding; kernel handles the lane tail).
    B2, K2 = 8, 200
    logits2 = jax.random.normal(jax.random.PRNGKey(1), (B2, K2), dtype=jnp.float32)
    ref2 = sinkhorn_knopp_ref(logits2, epsilon=0.05, num_iters=3)
    out2 = sinkhorn_knopp(logits2, epsilon=0.05, num_iters=3, imb_factor=1.0)
    out2 = jax.block_until_ready(out2)
    assert out2.shape == (B2, K2) and out2.dtype == jnp.float32
    assert jnp.allclose(out2, ref2, rtol=5e-4, atol=2e-6), float(
        jnp.max(jnp.abs(out2 - ref2))
    )

    print("KERNEL_OK")
</pallas_src>

<mosaic_0001>
module attributes {stable_mosaic.version = 11 : i64} {
  func.func @sinkhorn_kernel(%arg0: i32, %arg1: memref<8x128xf32, #tpu.memory_space<vmem>>, %arg2: memref<8x128xf32, #tpu.memory_space<vmem>>) attributes {dimension_semantics = [#tpu.dimension_semantics<arbitrary>], iteration_bounds = array<i64: 1>, scalar_prefetch = 0 : i64, scratch_operands = 0 : i64, tpu.core_type = #tpu.core_type<tc>, window_params = [{pipeline_mode = #tpu.pipeline_mode<synchronous>, transform_indices = @transform_0, window_bounds = array<i64: 8, 128>}, {pipeline_mode = #tpu.pipeline_mode<synchronous>, transform_indices = @transform_1, window_bounds = array<i64: 8, 128>}]} {
    %c0 = arith.constant 0 : index
    %c0_0 = arith.constant 0 : index
    %0 = vector.load %arg1[%c0, %c0_0] : memref<8x128xf32, #tpu.memory_space<vmem>>, vector<8x128xf32>
    %1 = vector.shape_cast %0 : vector<8x128xf32> to vector<1x8x128xf32>
    %cst = arith.constant dense<0xFF800000> : vector<1xf32>
    %2 = vector.multi_reduction <maximumf>, %1, %cst [1, 2] : vector<1x8x128xf32> to vector<1xf32>
    %3 = vector.shape_cast %2 : vector<1xf32> to vector<1x1x1xf32>
    %4 = vector.extract %3[0, 0, 0] : f32 from vector<1x1x1xf32>
    %5 = vector.broadcast %4 : f32 to vector<8x128xf32>
    %6 = arith.subf %0, %5 : vector<8x128xf32>
    %cst_1 = arith.constant 2.000000e+01 : f32
    %7 = vector.broadcast %cst_1 : f32 to vector<8x128xf32>
    %8 = arith.mulf %6, %7 : vector<8x128xf32>
    %9 = math.exp %8 : vector<8x128xf32>
    %c0_2 = arith.constant 0 : index
    %c0_3 = arith.constant 0 : index
    %10 = vector.load %arg2[%c0_2, %c0_3] : memref<8x128xf32, #tpu.memory_space<vmem>>, vector<8x128xf32>
    tpu.vector_store %arg2[%c0_2, %c0_3], %9 {strides = array<i32>} : memref<8x128xf32, #tpu.memory_space<vmem>>, vector<8x128xf32>,
    %c0_4 = arith.constant 0 : index
    %c0_5 = arith.constant 0 : index
    %11 = vector.load %arg2[%c0_4, %c0_5] : memref<8x128xf32, #tpu.memory_space<vmem>>, vector<8x128xf32>
    %cst_6 = arith.constant dense<0.000000e+00> : vector<128xf32>
    %12 = vector.multi_reduction <add>, %11, %cst_6 [0] : vector<8x128xf32> to vector<128xf32>
    %13 = vector.shape_cast %12 : vector<128xf32> to vector<1x128xf32>
    %14 = tpu.reciprocal %13 : vector<1x128xf32> -> vector<1x128xf32>
    %cst_7 = arith.constant 7.812500e-03 : f32
    %15 = vector.broadcast %cst_7 : f32 to vector<1x128xf32>
    %16 = arith.mulf %15, %14 : vector<1x128xf32>
    %17 = math.absf %16 : vector<1x128xf32>
    %cst_8 = arith.constant 0x7F800000 : f32
    %18 = vector.broadcast %cst_8 : f32 to vector<1x128xf32>
    %19 = arith.cmpf oeq, %17, %18 : vector<1x128xf32>
    %cst_9 = arith.constant 0.000000e+00 : f32
    %20 = vector.broadcast %cst_9 : f32 to vector<1x128xf32>
    %21 = arith.select %19, %20, %16 : vector<1x128xi1>, vector<1x128xf32>
    %22 = vector.shape_cast %21 : vector<1x128xf32> to vector<1x1x128xf32>
    %cst_10 = arith.constant dense<0xFF800000> : vector<1xf32>
    %23 = vector.multi_reduction <maximumf>, %22, %cst_10 [1, 2] : vector<1x1x128xf32> to vector<1xf32>
    %24 = vector.shape_cast %23 : vector<1xf32> to vector<1x1x1xf32>
    %25 = vector.extract %24[0, 0, 0] : f32 from vector<1x1x1xf32>
    %26 = vector.broadcast %25 : f32 to vector<1x128xf32>
    %27 = arith.select %19, %26, %21 : vector<1x128xi1>, vector<1x128xf32>
    %cst_11 = arith.constant dense<0.000000e+00> : vector<8x1xf32>
    %28 = tpu.matmul %11, %27, %cst_11 {dimension_numbers = #tpu.dot_dimension_numbers<[1], [1], [0], [0], [0, 0, 1, 0], [], []>} : vector<8x128xf32>, vector<1x128xf32>, vector<8x1xf32> -> vector<8x1xf32>
    %29 = vector.broadcast %27 : vector<1x128xf32> to vector<8x128xf32>
    %30 = arith.mulf %11, %29 : vector<8x128xf32>
    %31 = tpu.reciprocal %28 : vector<8x1xf32> -> vector<8x1xf32>
    %cst_12 = arith.constant 1.250000e-01 : f32
    %32 = vector.broadcast %cst_12 : f32 to vector<8x1xf32>
    %33 = arith.mulf %32, %31 : vector<8x1xf32>
    %34 = vector.broadcast %33 : vector<8x1xf32> to vector<8x128xf32>
    %35 = arith.mulf %30, %34 : vector<8x128xf32>
    %c0_13 = arith.constant 0 : index
    %c0_14 = arith.constant 0 : index
    %36 = vector.load %arg2[%c0_13, %c0_14] : memref<8x128xf32, #tpu.memory_space<vmem>>, vector<8x128xf32>
    tpu.vector_store %arg2[%c0_13, %c0_14], %35 {strides = array<i32>} : memref<8x128xf32, #tpu.memory_space<vmem>>, vector<8x128xf32>,
    %c0_15 = arith.constant 0 : index
    %c0_16 = arith.constant 0 : index
    %37 = vector.load %arg2[%c0_15, %c0_16] : memref<8x128xf32, #tpu.memory_space<vmem>>, vector<8x128xf32>
    %cst_17 = arith.constant dense<0.000000e+00> : vector<128xf32>
    %38 = vector.multi_reduction <add>, %37, %cst_17 [0] : vector<8x128xf32> to vector<128xf32>
    %39 = vector.shape_cast %38 : vector<128xf32> to vector<1x128xf32>
    %40 = tpu.reciprocal %39 : vector<1x128xf32> -> vector<1x128xf32>
    %cst_18 = arith.constant 7.812500e-03 : f32
    %41 = vector.broadcast %cst_18 : f32 to vector<1x128xf32>
    %42 = arith.mulf %41, %40 : vector<1x128xf32>
    %43 = math.absf %42 : vector<1x128xf32>
    %cst_19 = arith.constant 0x7F800000 : f32
    %44 = vector.broadcast %cst_19 : f32 to vector<1x128xf32>
    %45 = arith.cmpf oeq, %43, %44 : vector<1x128xf32>
    %cst_20 = arith.constant 0.000000e+00 : f32
    %46 = vector.broadcast %cst_20 : f32 to vector<1x128xf32>
    %47 = arith.select %45, %46, %42 : vector<1x128xi1>, vector<1x128xf32>
    %48 = vector.shape_cast %47 : vector<1x128xf32> to vector<1x1x128xf32>
    %cst_21 = arith.constant dense<0xFF800000> : vector<1xf32>
    %49 = vector.multi_reduction <maximumf>, %48, %cst_21 [1, 2] : vector<1x1x128xf32> to vector<1xf32>
    %50 = vector.shape_cast %49 : vector<1xf32> to vector<1x1x1xf32>
    %51 = vector.extract %50[0, 0, 0] : f32 from vector<1x1x1xf32>
    %52 = vector.broadcast %51 : f32 to vector<1x128xf32>
    %53 = arith.select %45, %52, %47 : vector<1x128xi1>, vector<1x128xf32>
    %cst_22 = arith.constant dense<0.000000e+00> : vector<8x1xf32>
    %54 = tpu.matmul %37, %53, %cst_22 {dimension_numbers = #tpu.dot_dimension_numbers<[1], [1], [0], [0], [0, 0, 1, 0], [], []>} : vector<8x128xf32>, vector<1x128xf32>, vector<8x1xf32> -> vector<8x1xf32>
    %55 = vector.broadcast %53 : vector<1x128xf32> to vector<8x128xf32>
    %56 = arith.mulf %37, %55 : vector<8x128xf32>
    %57 = tpu.reciprocal %54 : vector<8x1xf32> -> vector<8x1xf32>
    %cst_23 = arith.constant 1.250000e-01 : f32
    %58 = vector.broadcast %cst_23 : f32 to vector<8x1xf32>
    %59 = arith.mulf %58, %57 : vector<8x1xf32>
    %60 = vector.broadcast %59 : vector<8x1xf32> to vector<8x128xf32>
    %61 = arith.mulf %56, %60 : vector<8x128xf32>
    %c0_24 = arith.constant 0 : index
    %c0_25 = arith.constant 0 : index
    %62 = vector.load %arg2[%c0_24, %c0_25] : memref<8x128xf32, #tpu.memory_space<vmem>>, vector<8x128xf32>
    tpu.vector_store %arg2[%c0_24, %c0_25], %61 {strides = array<i32>} : memref<8x128xf32, #tpu.memory_space<vmem>>, vector<8x128xf32>,
    %c0_26 = arith.constant 0 : index
    %c0_27 = arith.constant 0 : index
    %63 = vector.load %arg2[%c0_26, %c0_27] : memref<8x128xf32, #tpu.memory_space<vmem>>, vector<8x128xf32>
    %cst_28 = arith.constant dense<0.000000e+00> : vector<128xf32>
    %64 = vector.multi_reduction <add>, %63, %cst_28 [0] : vector<8x128xf32> to vector<128xf32>
    %65 = vector.shape_cast %64 : vector<128xf32> to vector<1x128xf32>
    %66 = tpu.reciprocal %65 : vector<1x128xf32> -> vector<1x128xf32>
    %cst_29 = arith.constant 7.812500e-03 : f32
    %67 = vector.broadcast %cst_29 : f32 to vector<1x128xf32>
    %68 = arith.mulf %67, %66 : vector<1x128xf32>
    %69 = math.absf %68 : vector<1x128xf32>
    %cst_30 = arith.constant 0x7F800000 : f32
    %70 = vector.broadcast %cst_30 : f32 to vector<1x128xf32>
    %71 = arith.cmpf oeq, %69, %70 : vector<1x128xf32>
    %cst_31 = arith.constant 0.000000e+00 : f32
    %72 = vector.broadcast %cst_31 : f32 to vector<1x128xf32>
    %73 = arith.select %71, %72, %68 : vector<1x128xi1>, vector<1x128xf32>
    %74 = vector.shape_cast %73 : vector<1x128xf32> to vector<1x1x128xf32>
    %cst_32 = arith.constant dense<0xFF800000> : vector<1xf32>
    %75 = vector.multi_reduction <maximumf>, %74, %cst_32 [1, 2] : vector<1x1x128xf32> to vector<1xf32>
    %76 = vector.shape_cast %75 : vector<1xf32> to vector<1x1x1xf32>
    %77 = vector.extract %76[0, 0, 0] : f32 from vector<1x1x1xf32>
    %78 = vector.broadcast %77 : f32 to vector<1x128xf32>
    %79 = arith.select %71, %78, %73 : vector<1x128xi1>, vector<1x128xf32>
    %cst_33 = arith.constant dense<0.000000e+00> : vector<8x1xf32>
    %80 = tpu.matmul %63, %79, %cst_33 {dimension_numbers = #tpu.dot_dimension_numbers<[1], [1], [0], [0], [0, 0, 1, 0], [], []>} : vector<8x128xf32>, vector<1x128xf32>, vector<8x1xf32> -> vector<8x1xf32>
    %81 = vector.broadcast %79 : vector<1x128xf32> to vector<8x128xf32>
    %82 = arith.mulf %63, %81 : vector<8x128xf32>
    %83 = tpu.reciprocal %80 : vector<8x1xf32> -> vector<8x1xf32>
    %cst_34 = arith.constant 1.250000e-01 : f32
    %84 = vector.broadcast %cst_34 : f32 to vector<8x1xf32>
    %85 = arith.mulf %84, %83 : vector<8x1xf32>
    %86 = vector.broadcast %85 : vector<8x1xf32> to vector<8x128xf32>
    %87 = arith.mulf %82, %86 : vector<8x128xf32>
    %c0_35 = arith.constant 0 : index
    %c0_36 = arith.constant 0 : index
    %88 = vector.load %arg2[%c0_35, %c0_36] : memref<8x128xf32, #tpu.memory_space<vmem>>, vector<8x128xf32>
    tpu.vector_store %arg2[%c0_35, %c0_36], %87 {strides = array<i32>} : memref<8x128xf32, #tpu.memory_space<vmem>>, vector<8x128xf32>,
    %c0_37 = arith.constant 0 : index
    %c0_38 = arith.constant 0 : index
    %89 = vector.load %arg2[%c0_37, %c0_38] : memref<8x128xf32, #tpu.memory_space<vmem>>, vector<8x128xf32>
    %cst_39 = arith.constant dense<0.000000e+00> : vector<8xf32>
    %90 = vector.multi_reduction <add>, %89, %cst_39 [1] : vector<8x128xf32> to vector<8xf32>
    %91 = vector.shape_cast %90 : vector<8xf32> to vector<8x1xf32>
    %92 = tpu.reciprocal %91 : vector<8x1xf32> -> vector<8x1xf32>
    %93 = vector.broadcast %92 : vector<8x1xf32> to vector<8x128xf32>
    %94 = arith.mulf %89, %93 : vector<8x128xf32>
    %c0_40 = arith.constant 0 : index
    %c0_41 = arith.constant 0 : index
    %95 = vector.load %arg2[%c0_40, %c0_41] : memref<8x128xf32, #tpu.memory_space<vmem>>, vector<8x128xf32>
    tpu.vector_store %arg2[%c0_40, %c0_41], %94 {strides = array<i32>} : memref<8x128xf32, #tpu.memory_space<vmem>>, vector<8x128xf32>,
    return
  }
  func.func @transform_0(%arg0: i32) -> (i32, i32) {
    %c0_i32 = arith.constant 0 : i32
    %c0_i32_0 = arith.constant 0 : i32
    %c0_i32_1 = arith.constant 0 : i32
    return %c0_i32, %c0_i32_0 : i32, i32
  }
  func.func @transform_1(%arg0: i32) -> (i32, i32) {
    %c0_i32 = arith.constant 0 : i32
    %c0_i32_0 = arith.constant 0 : i32
    %c0_i32_1 = arith.constant 0 : i32
    return %c0_i32, %c0_i32_0 : i32, i32
  }
}

module attributes {stable_mosaic.version = 11 : i64} {
  func.func @sinkhorn_kernel(%arg0: i32, %arg1: memref<8x128xf32, #tpu.memory_space<vmem>>, %arg2: memref<8x128xf32, #tpu.memory_space<vmem>>) attributes {dimension_semantics = [#tpu.dimension_semantics<arbitrary>], iteration_bounds = array<i64: 1>, scalar_prefetch = 0 : i64, scratch_operands = 0 : i64, tpu.core_type = #tpu.core_type<tc>, window_params = [{pipeline_mode = #tpu.pipeline_mode<synchronous>, transform_indices = @transform_0, window_bounds = array<i64: 8, 128>}, {pipeline_mode = #tpu.pipeline_mode<synchronous>, transform_indices = @transform_1, window_bounds = array<i64: 8, 128>}]} {
    %c0 = arith.constant 0 : index
    %c0_0 = arith.constant 0 : index
    %0 = vector.load %arg1[%c0, %c0_0] : memref<8x128xf32, #tpu.memory_space<vmem>>, vector<8x128xf32>
    %1 = vector.shape_cast %0 : vector<8x128xf32> to vector<1x8x128xf32>
    %cst = arith.constant dense<0xFF800000> : vector<1xf32>
    %2 = vector.multi_reduction <maximumf>, %1, %cst [1, 2] : vector<1x8x128xf32> to vector<1xf32>
    %3 = vector.shape_cast %2 : vector<1xf32> to vector<1x1x1xf32>
    %4 = vector.extract %3[0, 0, 0] : f32 from vector<1x1x1xf32>
    %5 = vector.broadcast %4 : f32 to vector<8x128xf32>
    %6 = arith.subf %0, %5 : vector<8x128xf32>
    %cst_1 = arith.constant 2.000000e+01 : f32
    %7 = vector.broadcast %cst_1 : f32 to vector<8x128xf32>
    %8 = arith.mulf %6, %7 : vector<8x128xf32>
    %9 = math.exp %8 : vector<8x128xf32>
    %c0_2 = arith.constant 0 : index
    %c0_3 = arith.constant 0 : index
    %10 = vector.load %arg2[%c0_2, %c0_3] : memref<8x128xf32, #tpu.memory_space<vmem>>, vector<8x128xf32>
    tpu.vector_store %arg2[%c0_2, %c0_3], %9 {strides = array<i32>} : memref<8x128xf32, #tpu.memory_space<vmem>>, vector<8x128xf32>,
    %c0_4 = arith.constant 0 : index
    %c0_5 = arith.constant 0 : index
    %11 = vector.load %arg2[%c0_4, %c0_5] : memref<8x128xf32, #tpu.memory_space<vmem>>, vector<8x128xf32>
    %cst_6 = arith.constant dense<0.000000e+00> : vector<128xf32>
    %12 = vector.multi_reduction <add>, %11, %cst_6 [0] : vector<8x128xf32> to vector<128xf32>
    %13 = vector.shape_cast %12 : vector<128xf32> to vector<1x128xf32>
    %14 = tpu.reciprocal %13 : vector<1x128xf32> -> vector<1x128xf32>
    %cst_7 = arith.constant 7.812500e-03 : f32
    %15 = vector.broadcast %cst_7 : f32 to vector<1x128xf32>
    %16 = arith.mulf %15, %14 : vector<1x128xf32>
    %17 = math.absf %16 : vector<1x128xf32>
    %cst_8 = arith.constant 0x7F800000 : f32
    %18 = vector.broadcast %cst_8 : f32 to vector<1x128xf32>
    %19 = arith.cmpf oeq, %17, %18 : vector<1x128xf32>
    %cst_9 = arith.constant 0.000000e+00 : f32
    %20 = vector.broadcast %cst_9 : f32 to vector<1x128xf32>
    %21 = arith.select %19, %20, %16 : vector<1x128xi1>, vector<1x128xf32>
    %22 = vector.shape_cast %21 : vector<1x128xf32> to vector<1x1x128xf32>
    %cst_10 = arith.constant dense<0xFF800000> : vector<1xf32>
    %23 = vector.multi_reduction <maximumf>, %22, %cst_10 [1, 2] : vector<1x1x128xf32> to vector<1xf32>
    %24 = vector.shape_cast %23 : vector<1xf32> to vector<1x1x1xf32>
    %25 = vector.extract %24[0, 0, 0] : f32 from vector<1x1x1xf32>
    %26 = vector.broadcast %25 : f32 to vector<1x128xf32>
    %27 = arith.select %19, %26, %21 : vector<1x128xi1>, vector<1x128xf32>
    %cst_11 = arith.constant dense<0.000000e+00> : vector<8x1xf32>
    %28 = tpu.matmul %11, %27, %cst_11 {dimension_numbers = #tpu.dot_dimension_numbers<[1], [1], [0], [0], [0, 0, 1, 0], [], []>} : vector<8x128xf32>, vector<1x128xf32>, vector<8x1xf32> -> vector<8x1xf32>
    %29 = vector.broadcast %27 : vector<1x128xf32> to vector<8x128xf32>
    %30 = arith.mulf %11, %29 : vector<8x128xf32>
    %31 = tpu.reciprocal %28 : vector<8x1xf32> -> vector<8x1xf32>
    %cst_12 = arith.constant 1.250000e-01 : f32
    %32 = vector.broadcast %cst_12 : f32 to vector<8x1xf32>
    %33 = arith.mulf %32, %31 : vector<8x1xf32>
    %34 = vector.broadcast %33 : vector<8x1xf32> to vector<8x128xf32>
    %35 = arith.mulf %30, %34 : vector<8x128xf32>
    %c0_13 = arith.constant 0 : index
    %c0_14 = arith.constant 0 : index
    %36 = vector.load %arg2[%c0_13, %c0_14] : memref<8x128xf32, #tpu.memory_space<vmem>>, vector<8x128xf32>
    tpu.vector_store %arg2[%c0_13, %c0_14], %35 {strides = array<i32>} : memref<8x128xf32, #tpu.memory_space<vmem>>, vector<8x128xf32>,
    %c0_15 = arith.constant 0 : index
    %c0_16 = arith.constant 0 : index
    %37 = vector.load %arg2[%c0_15, %c0_16] : memref<8x128xf32, #tpu.memory_space<vmem>>, vector<8x128xf32>
    %cst_17 = arith.constant dense<0.000000e+00> : vector<128xf32>
    %38 = vector.multi_reduction <add>, %37, %cst_17 [0] : vector<8x128xf32> to vector<128xf32>
    %39 = vector.shape_cast %38 : vector<128xf32> to vector<1x128xf32>
    %40 = tpu.reciprocal %39 : vector<1x128xf32> -> vector<1x128xf32>
    %cst_18 = arith.constant 7.812500e-03 : f32
    %41 = vector.broadcast %cst_18 : f32 to vector<1x128xf32>
    %42 = arith.mulf %41, %40 : vector<1x128xf32>
    %43 = math.absf %42 : vector<1x128xf32>
    %cst_19 = arith.constant 0x7F800000 : f32
    %44 = vector.broadcast %cst_19 : f32 to vector<1x128xf32>
    %45 = arith.cmpf oeq, %43, %44 : vector<1x128xf32>
    %cst_20 = arith.constant 0.000000e+00 : f32
    %46 = vector.broadcast %cst_20 : f32 to vector<1x128xf32>
    %47 = arith.select %45, %46, %42 : vector<1x128xi1>, vector<1x128xf32>
    %48 = vector.shape_cast %47 : vector<1x128xf32> to vector<1x1x128xf32>
    %cst_21 = arith.constant dense<0xFF800000> : vector<1xf32>
    %49 = vector.multi_reduction <maximumf>, %48, %cst_21 [1, 2] : vector<1x1x128xf32> to vector<1xf32>
    %50 = vector.shape_cast %49 : vector<1xf32> to vector<1x1x1xf32>
    %51 = vector.extract %50[0, 0, 0] : f32 from vector<1x1x1xf32>
    %52 = vector.broadcast %51 : f32 to vector<1x128xf32>
    %53 = arith.select %45, %52, %47 : vector<1x128xi1>, vector<1x128xf32>
    %cst_22 = arith.constant dense<0.000000e+00> : vector<8x1xf32>
    %54 = tpu.matmul %37, %53, %cst_22 {dimension_numbers = #tpu.dot_dimension_numbers<[1], [1], [0], [0], [0, 0, 1, 0], [], []>} : vector<8x128xf32>, vector<1x128xf32>, vector<8x1xf32> -> vector<8x1xf32>
    %55 = vector.broadcast %53 : vector<1x128xf32> to vector<8x128xf32>
    %56 = arith.mulf %37, %55 : vector<8x128xf32>
    %57 = tpu.reciprocal %54 : vector<8x1xf32> -> vector<8x1xf32>
    %cst_23 = arith.constant 1.250000e-01 : f32
    %58 = vector.broadcast %cst_23 : f32 to vector<8x1xf32>
    %59 = arith.mulf %58, %57 : vector<8x1xf32>
    %60 = vector.broadcast %59 : vector<8x1xf32> to vector<8x128xf32>
    %61 = arith.mulf %56, %60 : vector<8x128xf32>
    %c0_24 = arith.constant 0 : index
    %c0_25 = arith.constant 0 : index
    %62 = vector.load %arg2[%c0_24, %c0_25] : memref<8x128xf32, #tpu.memory_space<vmem>>, vector<8x128xf32>
    tpu.vector_store %arg2[%c0_24, %c0_25], %61 {strides = array<i32>} : memref<8x128xf32, #tpu.memory_space<vmem>>, vector<8x128xf32>,
    %c0_26 = arith.constant 0 : index
    %c0_27 = arith.constant 0 : index
    %63 = vector.load %arg2[%c0_26, %c0_27] : memref<8x128xf32, #tpu.memory_space<vmem>>, vector<8x128xf32>
    %cst_28 = arith.constant dense<0.000000e+00> : vector<128xf32>
    %64 = vector.multi_reduction <add>, %63, %cst_28 [0] : vector<8x128xf32> to vector<128xf32>
    %65 = vector.shape_cast %64 : vector<128xf32> to vector<1x128xf32>
    %66 = tpu.reciprocal %65 : vector<1x128xf32> -> vector<1x128xf32>
    %cst_29 = arith.constant 7.812500e-03 : f32
    %67 = vector.broadcast %cst_29 : f32 to vector<1x128xf32>
    %68 = arith.mulf %67, %66 : vector<1x128xf32>
    %69 = math.absf %68 : vector<1x128xf32>
    %cst_30 = arith.constant 0x7F800000 : f32
    %70 = vector.broadcast %cst_30 : f32 to vector<1x128xf32>
    %71 = arith.cmpf oeq, %69, %70 : vector<1x128xf32>
    %cst_31 = arith.constant 0.000000e+00 : f32
    %72 = vector.broadcast %cst_31 : f32 to vector<1x128xf32>
    %73 = arith.select %71, %72, %68 : vector<1x128xi1>, vector<1x128xf32>
    %74 = vector.shape_cast %73 : vector<1x128xf32> to vector<1x1x128xf32>
    %cst_32 = arith.constant dense<0xFF800000> : vector<1xf32>
    %75 = vector.multi_reduction <maximumf>, %74, %cst_32 [1, 2] : vector<1x1x128xf32> to vector<1xf32>
    %76 = vector.shape_cast %75 : vector<1xf32> to vector<1x1x1xf32>
    %77 = vector.extract %76[0, 0, 0] : f32 from vector<1x1x1xf32>
    %78 = vector.broadcast %77 : f32 to vector<1x128xf32>
    %79 = arith.select %71, %78, %73 : vector<1x128xi1>, vector<1x128xf32>
    %cst_33 = arith.constant dense<0.000000e+00> : vector<8x1xf32>
    %80 = tpu.matmul %63, %79, %cst_33 {dimension_numbers = #tpu.dot_dimension_numbers<[1], [1], [0], [0], [0, 0, 1, 0], [], []>} : vector<8x128xf32>, vector<1x128xf32>, vector<8x1xf32> -> vector<8x1xf32>
    %81 = vector.broadcast %79 : vector<1x128xf32> to vector<8x128xf32>
    %82 = arith.mulf %63, %81 : vector<8x128xf32>
    %83 = tpu.reciprocal %80 : vector<8x1xf32> -> vector<8x1xf32>
    %cst_34 = arith.constant 1.250000e-01 : f32
    %84 = vector.broadcast %cst_34 : f32 to vector<8x1xf32>
    %85 = arith.mulf %84, %83 : vector<8x1xf32>
    %86 = vector.broadcast %85 : vector<8x1xf32> to vector<8x128xf32>
    %87 = arith.mulf %82, %86 : vector<8x128xf32>
    %c0_35 = arith.constant 0 : index
    %c0_36 = arith.constant 0 : index
    %88 = vector.load %arg2[%c0_35, %c0_36] : memref<8x128xf32, #tpu.memory_space<vmem>>, vector<8x128xf32>
    tpu.vector_store %arg2[%c0_35, %c0_36], %87 {strides = array<i32>} : memref<8x128xf32, #tpu.memory_space<vmem>>, vector<8x128xf32>,
    %c0_37 = arith.constant 0 : index
    %c0_38 = arith.constant 0 : index
    %89 = vector.load %arg2[%c0_37, %c0_38] : memref<8x128xf32, #tpu.memory_space<vmem>>, vector<8x128xf32>
    %cst_39 = arith.constant dense<0.000000e+00> : vector<8xf32>
    %90 = vector.multi_reduction <add>, %89, %cst_39 [1] : vector<8x128xf32> to vector<8xf32>
    %91 = vector.shape_cast %90 : vector<8xf32> to vector<8x1xf32>
    %92 = tpu.reciprocal %91 : vector<8x1xf32> -> vector<8x1xf32>
    %93 = vector.broadcast %92 : vector<8x1xf32> to vector<8x128xf32>
    %94 = arith.mulf %89, %93 : vector<8x128xf32>
    %c0_40 = arith.constant 0 : index
    %c0_41 = arith.constant 0 : index
    %95 = vector.load %arg2[%c0_40, %c0_41] : memref<8x128xf32, #tpu.memory_space<vmem>>, vector<8x128xf32>
    tpu.vector_store %arg2[%c0_40, %c0_41], %94 {strides = array<i32>} : memref<8x128xf32, #tpu.memory_space<vmem>>, vector<8x128xf32>,
    return
  }
  func.func @transform_0(%arg0: i32) -> (i32, i32) {
    %c0_i32 = arith.constant 0 : i32
    %c0_i32_0 = arith.constant 0 : i32
    %c0_i32_1 = arith.constant 0 : i32
    return %c0_i32, %c0_i32_0 : i32, i32
  }
  func.func @transform_1(%arg0: i32) -> (i32, i32) {
    %c0_i32 = arith.constant 0 : i32
    %c0_i32_0 = arith.constant 0 : i32
    %c0_i32_1 = arith.constant 0 : i32
    return %c0_i32, %c0_i32_0 : i32, i32
  }
}

</mosaic_0001>

<llo_original>
// kernel: tpu_custom_call.1
$region0: #{tpu_custom_call.1}
  #allocation0 [shape = 'u32[]', space=smem, size = 0x4, offset = 0x4, fixed_abs, tag = 'smem constant byte address 0x4 - core index']
  #allocation1 [shape = 'u32[144,128]{1,0:T(1,128)}', space=vmem, size = 0x12000, scoped, tag = 'internal scratch']
  %s0 = inlined_call_operand.hbm [shape: f32[8,128], index: 0, kind: input, shape index: {}]
  %s1 = inlined_call_operand.hbm [shape: f32[8,128], index: 1, kind: output, shape index: {}]
  %s2 = sld [smem:[#allocation0]]
  $region18: #{tpu_custom_call.1} parent=0
    _
  %s4 = ssub.s32 1, %s2
  %s5 = scalar_select 0, %s4, %s2
  $region1: #{tpu_custom_call.1} parent=0
    #allocation2 [shape = 'u8[4096]{0}', space=vmem, size = 0x1000, scoped, tag = 'input window, operand 0, single buffered']
    #allocation3 [shape = 's32[1]{0}', space=sflag, size = 0x4, scoped, tag = 'scoped memory for tpu_custom_call.1']
    #allocation4 [shape = 's32[1]{0}', space=sflag, size = 0x4, scoped, tag = 'scoped memory for tpu_custom_call.1']
    #allocation5 [shape = 'u8[4096]{0}', space=vmem, size = 0x1000, scoped, tag = 'output window, operand 0, single buffered']
    %6 = vsyncpa [#allocation3], 0
    %7 = vsyncpa [#allocation4], 0
    // Predicated region
    $region2: #{tpu_custom_call.1} parent=1 // pred_check
      _
    $region3: #{tpu_custom_call.1} parent=1 // pred_check_branch
      %9 = sbr.rel (0) target = $region5
    $region4: #{tpu_custom_call.1} parent=1 // pred_region
      %s11 = ssub.s32 128, 128
      %12 = vsyncadd [#allocation3], %s11
      %s14 = sshll.u32 [#allocation2], 4
      %s15 = int_to_ptr.vmem [resolvable:$true] %s14
      %17 = dma.hbm_to_vmem [thread:$0]  %s0, 128, %s15, [#allocation3]
    $region5: #{tpu_custom_call.1} parent=1 // pred_fallthru
      _
    // Predicated region
    $region6: #{tpu_custom_call.1} parent=1 // pred_check
      _
    $region7: #{tpu_custom_call.1} parent=1 // pred_check_branch
      %19 = sbr.rel (0) target = $region9
    $region8: #{tpu_custom_call.1} parent=1 // pred_region
      %20 = dma.done [#allocation3], 128
    $region9: #{tpu_custom_call.1} parent=1 // pred_fallthru
      _
    %v21 = vld [vmem:[#allocation2] sm:$0xff]
    %22 = vmax.xlane.f32.xlu0 %v21
    %v23 = vpop.xlane.xlu0 %22
    %v24 = vrot.slane %v23, 4
    %v25 = vmax.f32 %v23, %v24
    %v26 = vrot.slane %v25, 2
    %v27 = vmax.f32 %v25, %v26
    %v28 = vrot.slane %v27, 1
    %v29 = vmax.f32 %v27, %v28
    %s30 = vtos %v29
    %v31 = vstv %s30
    %v32 = vsub.f32 %v21, %v31
    %v33 = vmul.f32 %v32, 20.0
    %v34 = vmul.f32 %v33, 1.442695
    %v35 = vpow.pop %v34
    %36 = vst [vmem:[#allocation5] sm:$0xff] %v35
    %v37 = vld [vmem:[#allocation5] sm:$0xff]
    %v38 = vrot.slane %v37, 4
    %v39 = vadd.f32 %v37, %v38
    %v40 = vrot.slane %v39, 2
    %v41 = vadd.f32 %v39, %v40
    %v42 = vrot.slane %v41, 1
    %v43 = vadd.f32 %v41, %v42
    %v44 = vrcp.pop %v43
    %v45 = vmul.f32 %v44, 0.0078125
    %v46 = vand.u32 2147483647, %v45
    %vm47 = vcmp.eq.f32.partialorder %v46, inf
    %v48 = vsel %vm47, 0.0, %v45
    %49 = vmax.xlane.f32.xlu0 %v48
    %v50 = vpop.xlane.xlu0 %49
    %s51 = vtos %v50
    %v52 = vstv %s51
    %v53 = vsel %vm47, %v52, %v45
    %v54 = vmul.f32 %v37, %v53
    %55 = vadd.xlane.f32.xlu0 %v54
    %v56 = vpop.xlane.xlu0 %55
    %v57 = vrcp.pop %v56
    %v58 = vmul.f32 %v57, 0.125
    %v59 = vmul.f32 %v54, %v58
    %60 = vst [vmem:[#allocation5] sm:$0xff] %v59
    %v61 = vld [vmem:[#allocation5] sm:$0xff]
    %v62 = vrot.slane %v61, 4
    %v63 = vadd.f32 %v61, %v62
    %v64 = vrot.slane %v63, 2
    %v65 = vadd.f32 %v63, %v64
    %v66 = vrot.slane %v65, 1
    %v67 = vadd.f32 %v65, %v66
    %v68 = vrcp.pop %v67
    %v69 = vmul.f32 %v68, 0.0078125
    %v70 = vand.u32 2147483647, %v69
    %vm71 = vcmp.eq.f32.partialorder %v70, inf
    %v72 = vsel %vm71, 0.0, %v69
    %73 = vmax.xlane.f32.xlu0 %v72
    %v74 = vpop.xlane.xlu0 %73
    %s75 = vtos %v74
    %v76 = vstv %s75
    %v77 = vsel %vm71, %v76, %v69
    %v78 = vmul.f32 %v61, %v77
    %79 = vadd.xlane.f32.xlu0 %v78
    %v80 = vpop.xlane.xlu0 %79
    %v81 = vrcp.pop %v80
    %v82 = vmul.f32 %v81, 0.125
    %v83 = vmul.f32 %v78, %v82
    %84 = vst [vmem:[#allocation5] sm:$0xff] %v83
    %v85 = vld [vmem:[#allocation5] sm:$0xff]
    %v86 = vrot.slane %v85, 4
    %v87 = vadd.f32 %v85, %v86
    %v88 = vrot.slane %v87, 2
    %v89 = vadd.f32 %v87, %v88
    %v90 = vrot.slane %v89, 1
    %v91 = vadd.f32 %v89, %v90
    %v92 = vrcp.pop %v91
    %v93 = vmul.f32 %v92, 0.0078125
    %v94 = vand.u32 2147483647, %v93
    %vm95 = vcmp.eq.f32.partialorder %v94, inf
    %v96 = vsel %vm95, 0.0, %v93
    %97 = vmax.xlane.f32.xlu0 %v96
    %v98 = vpop.xlane.xlu0 %97
    %s99 = vtos %v98
    %v100 = vstv %s99
    %v101 = vsel %vm95, %v100, %v93
    %v102 = vmul.f32 %v85, %v101
    %103 = vadd.xlane.f32.xlu0 %v102
    %v104 = vpop.xlane.xlu0 %103
    %v105 = vrcp.pop %v104
    %v106 = vmul.f32 %v105, 0.125
    %v107 = vmul.f32 %v102, %v106
    %108 = vst [vmem:[#allocation5] sm:$0xff] %v107
    %v109 = vld [vmem:[#allocation5] sm:$0xff]
    %110 = vadd.xlane.f32.xlu0 %v109
    %v111 = vpop.xlane.xlu0 %110
    %v112 = vrcp.pop %v111
    %v113 = vmul.f32 %v109, %v112
    %114 = vst [vmem:[#allocation5] sm:$0xff] %v113
    // Predicated region
    $region10: #{tpu_custom_call.1} parent=1 // pred_check
      _
    $region11: #{tpu_custom_call.1} parent=1 // pred_check_branch
      %116 = sbr.rel (0) target = $region13
    $region12: #{tpu_custom_call.1} parent=1 // pred_region
      %s118 = ssub.s32 128, 128
      %119 = vsyncadd [#allocation4], %s118
      %s121 = sshll.u32 [#allocation5], 4
      %s122 = int_to_ptr.vmem [resolvable:$true] %s121
      %124 = dma.vmem_to_hbm [thread:$0]  %s122, 128, %s1, [#allocation4]
    $region13: #{tpu_custom_call.1} parent=1 // pred_fallthru
      _
    // Predicated region
    $region14: #{tpu_custom_call.1} parent=1 // pred_check
      _
    $region15: #{tpu_custom_call.1} parent=1 // pred_check_branch
      %126 = sbr.rel (0) target = $region17
    $region16: #{tpu_custom_call.1} parent=1 // pred_region
      %127 = dma.done [#allocation4], 128
    $region17: #{tpu_custom_call.1} parent=1 // pred_fallthru
      _
    %128 = vsyncpa [#allocation3], 1
    %129 = vsyncpa [#allocation4], 1

// kernel: tpu_custom_call.1
$region0: #{tpu_custom_call.1}
  #allocation0 [shape = 'u32[]', space=smem, size = 0x4, offset = 0x4, fixed_abs, tag = 'smem constant byte address 0x4 - core index']
  #allocation1 [shape = 'u32[144,128]{1,0:T(1,128)}', space=vmem, size = 0x12000, scoped, tag = 'internal scratch']
  %s0 = inlined_call_operand.hbm [shape: f32[8,128], index: 0, kind: input, shape index: {}]
  %s1 = inlined_call_operand.hbm [shape: f32[8,128], index: 1, kind: output, shape index: {}]
  %s2 = sld [smem:[#allocation0]]
  $region18: #{tpu_custom_call.1} parent=0
    _
  %s4 = ssub.s32 1, %s2
  %s5 = scalar_select 0, %s4, %s2
  $region1: #{tpu_custom_call.1} parent=0
    #allocation2 [shape = 'u8[4096]{0}', space=vmem, size = 0x1000, scoped, tag = 'input window, operand 0, single buffered']
    #allocation3 [shape = 's32[1]{0}', space=sflag, size = 0x4, scoped, tag = 'scoped memory for tpu_custom_call.1']
    #allocation4 [shape = 's32[1]{0}', space=sflag, size = 0x4, scoped, tag = 'scoped memory for tpu_custom_call.1']
    #allocation5 [shape = 'u8[4096]{0}', space=vmem, size = 0x1000, scoped, tag = 'output window, operand 0, single buffered']
    %6 = vsyncpa [#allocation3], 0
    %7 = vsyncpa [#allocation4], 0
    // Predicated region
    $region2: #{tpu_custom_call.1} parent=1 // pred_check
      _
    $region3: #{tpu_custom_call.1} parent=1 // pred_check_branch
      %9 = sbr.rel (0) target = $region5
    $region4: #{tpu_custom_call.1} parent=1 // pred_region
      %s11 = ssub.s32 128, 128
      %12 = vsyncadd [#allocation3], %s11
      %s14 = sshll.u32 [#allocation2], 4
      %s15 = int_to_ptr.vmem [resolvable:$true] %s14
      %17 = dma.hbm_to_vmem [thread:$0]  %s0, 128, %s15, [#allocation3]
    $region5: #{tpu_custom_call.1} parent=1 // pred_fallthru
      _
    // Predicated region
    $region6: #{tpu_custom_call.1} parent=1 // pred_check
      _
    $region7: #{tpu_custom_call.1} parent=1 // pred_check_branch
      %19 = sbr.rel (0) target = $region9
    $region8: #{tpu_custom_call.1} parent=1 // pred_region
      %20 = dma.done [#allocation3], 128
    $region9: #{tpu_custom_call.1} parent=1 // pred_fallthru
      _
    %v21 = vld [vmem:[#allocation2] sm:$0xff]
    %22 = vmax.xlane.f32.xlu0 %v21
    %v23 = vpop.xlane.xlu0 %22
    %v24 = vrot.slane %v23, 4
    %v25 = vmax.f32 %v23, %v24
    %v26 = vrot.slane %v25, 2
    %v27 = vmax.f32 %v25, %v26
    %v28 = vrot.slane %v27, 1
    %v29 = vmax.f32 %v27, %v28
    %s30 = vtos %v29
    %v31 = vstv %s30
    %v32 = vsub.f32 %v21, %v31
    %v33 = vmul.f32 %v32, 20.0
    %v34 = vmul.f32 %v33, 1.442695
    %v35 = vpow.pop %v34
    %36 = vst [vmem:[#allocation5] sm:$0xff] %v35
    %v37 = vld [vmem:[#allocation5] sm:$0xff]
    %v38 = vrot.slane %v37, 4
    %v39 = vadd.f32 %v37, %v38
    %v40 = vrot.slane %v39, 2
    %v41 = vadd.f32 %v39, %v40
    %v42 = vrot.slane %v41, 1
    %v43 = vadd.f32 %v41, %v42
    %v44 = vrcp.pop %v43
    %v45 = vmul.f32 %v44, 0.0078125
    %v46 = vand.u32 2147483647, %v45
    %vm47 = vcmp.eq.f32.partialorder %v46, inf
    %v48 = vsel %vm47, 0.0, %v45
    %49 = vmax.xlane.f32.xlu0 %v48
    %v50 = vpop.xlane.xlu0 %49
    %s51 = vtos %v50
    %v52 = vstv %s51
    %v53 = vsel %vm47, %v52, %v45
    %v54 = vmul.f32 %v37, %v53
    %55 = vadd.xlane.f32.xlu0 %v54
    %v56 = vpop.xlane.xlu0 %55
    %v57 = vrcp.pop %v56
    %v58 = vmul.f32 %v57, 0.125
    %v59 = vmul.f32 %v54, %v58
    %60 = vst [vmem:[#allocation5] sm:$0xff] %v59
    %v61 = vld [vmem:[#allocation5] sm:$0xff]
    %v62 = vrot.slane %v61, 4
    %v63 = vadd.f32 %v61, %v62
    %v64 = vrot.slane %v63, 2
    %v65 = vadd.f32 %v63, %v64
    %v66 = vrot.slane %v65, 1
    %v67 = vadd.f32 %v65, %v66
    %v68 = vrcp.pop %v67
    %v69 = vmul.f32 %v68, 0.0078125
    %v70 = vand.u32 2147483647, %v69
    %vm71 = vcmp.eq.f32.partialorder %v70, inf
    %v72 = vsel %vm71, 0.0, %v69
    %73 = vmax.xlane.f32.xlu0 %v72
    %v74 = vpop.xlane.xlu0 %73
    %s75 = vtos %v74
    %v76 = vstv %s75
    %v77 = vsel %vm71, %v76, %v69
    %v78 = vmul.f32 %v61, %v77
    %79 = vadd.xlane.f32.xlu0 %v78
    %v80 = vpop.xlane.xlu0 %79
    %v81 = vrcp.pop %v80
    %v82 = vmul.f32 %v81, 0.125
    %v83 = vmul.f32 %v78, %v82
    %84 = vst [vmem:[#allocation5] sm:$0xff] %v83
    %v85 = vld [vmem:[#allocation5] sm:$0xff]
    %v86 = vrot.slane %v85, 4
    %v87 = vadd.f32 %v85, %v86
    %v88 = vrot.slane %v87, 2
    %v89 = vadd.f32 %v87, %v88
    %v90 = vrot.slane %v89, 1
    %v91 = vadd.f32 %v89, %v90
    %v92 = vrcp.pop %v91
    %v93 = vmul.f32 %v92, 0.0078125
    %v94 = vand.u32 2147483647, %v93
    %vm95 = vcmp.eq.f32.partialorder %v94, inf
    %v96 = vsel %vm95, 0.0, %v93
    %97 = vmax.xlane.f32.xlu0 %v96
    %v98 = vpop.xlane.xlu0 %97
    %s99 = vtos %v98
    %v100 = vstv %s99
    %v101 = vsel %vm95, %v100, %v93
    %v102 = vmul.f32 %v85, %v101
    %103 = vadd.xlane.f32.xlu0 %v102
    %v104 = vpop.xlane.xlu0 %103
    %v105 = vrcp.pop %v104
    %v106 = vmul.f32 %v105, 0.125
    %v107 = vmul.f32 %v102, %v106
    %108 = vst [vmem:[#allocation5] sm:$0xff] %v107
    %v109 = vld [vmem:[#allocation5] sm:$0xff]
    %110 = vadd.xlane.f32.xlu0 %v109
    %v111 = vpop.xlane.xlu0 %110
    %v112 = vrcp.pop %v111
    %v113 = vmul.f32 %v109, %v112
    %114 = vst [vmem:[#allocation5] sm:$0xff] %v113
    // Predicated region
    $region10: #{tpu_custom_call.1} parent=1 // pred_check
      _
    $region11: #{tpu_custom_call.1} parent=1 // pred_check_branch
      %116 = sbr.rel (0) target = $region13
    $region12: #{tpu_custom_call.1} parent=1 // pred_region
      %s118 = ssub.s32 128, 128
      %119 = vsyncadd [#allocation4], %s118
      %s121 = sshll.u32 [#allocation5], 4
      %s122 = int_to_ptr.vmem [resolvable:$true] %s121
      %124 = dma.vmem_to_hbm [thread:$0]  %s122, 128, %s1, [#allocation4]
    $region13: #{tpu_custom_call.1} parent=1 // pred_fallthru
      _
    // Predicated region
    $region14: #{tpu_custom_call.1} parent=1 // pred_check
      _
    $region15: #{tpu_custom_call.1} parent=1 // pred_check_branch
      %126 = sbr.rel (0) target = $region17
    $region16: #{tpu_custom_call.1} parent=1 // pred_region
      %127 = dma.done [#allocation4], 128
    $region17: #{tpu_custom_call.1} parent=1 // pred_fallthru
      _
    %128 = vsyncpa [#allocation3], 1
    %129 = vsyncpa [#allocation4], 1

</llo_original>
